<compile_context>
chip_gen: v6e
topology: v6e:2x2x1
jax: 0.10.0
libtpu: 0.0.40
codegen_flags: <defaults>
</compile_context>

<pallas_src>
import functools
import math

import jax
import jax.numpy as jnp
from jax.experimental import pallas as pl
from jax.experimental.pallas import tpu as pltpu

_LANE = 128
_SUBLANE = 8


def _round_up(n, m):
    return ((n + m - 1) // m) * m


def _fused_kernel(x_ref, w_ref, out_ref, *, half_dim, feat_axis):
    """One fused block: feature 0 -> x, [1,1+hd) -> sin, [1+hd,1+2hd) -> cos.

    Padded feature indices (>= 1+2*half_dim) evaluate cos(0)=1 and are sliced
    off by the wrapper.  Transposed path: x (1, TB), w (feat_pad, 1),
    out (feat_pad, TB).  Natural path: x (TB, 1), w (1, feat_pad),
    out (TB, feat_pad).
    """
    shape = out_ref.shape
    idx = jax.lax.broadcasted_iota(jnp.int32, shape, feat_axis)
    x = x_ref[...]                                   # f32
    phase = x * w_ref[...]                           # broadcast to full block
    fused = jnp.where(
        idx == 0,
        jnp.broadcast_to(x, shape),
        jnp.where(idx <= half_dim, jnp.sin(phase), jnp.cos(phase)),
    )
    out_ref[...] = fused.astype(out_ref.dtype)


def random_or_learned_sinusoidal_pos_emb(x, weights, *, out_dtype=jnp.float32,
                                         vmem_budget_bytes=8 << 20,
                                         max_tile=32768):
    """x: (B,) timesteps; weights: (half_dim,) parameter.

    Returns (B, 2*half_dim + 1) == concat([x, sin(f), cos(f)], -1),
    f = x[:, None] * weights[None, :] * 2*pi  (PyTorch module semantics).
    """
    assert x.ndim == 1 and weights.ndim == 1
    b = x.shape[0]
    half_dim = weights.shape[0]
    n_feat = 2 * half_dim + 1

    x_f32 = x.astype(jnp.float32)
    # Fold the constant 2*pi into the (constant) parameter once, wrapper-side.
    w2pi = weights.astype(jnp.float32) * (2.0 * math.pi)
    dtype_bytes = jnp.dtype(out_dtype).itemsize

    natural = (2 * half_dim) >= _LANE
    if natural:
        # Features already lane-dense: emit directly in (B, feat) layout.
        feat_pad = _round_up(n_feat, _LANE)
        unit = _SUBLANE
    else:
        # Small half_dim: batch on the lane axis, feature rows padded to 8.
        feat_pad = _round_up(n_feat, _SUBLANE)
        unit = _LANE

    # Batch tile: as big as an ~8 MiB double-buffered output budget allows,
    # but split into >=2 grid steps when the batch allows (v7x megacore).
    per_batch_bytes = feat_pad * dtype_bytes
    cap = (vmem_budget_bytes // (2 * per_batch_bytes)) // unit * unit
    cap = max(unit, min(cap, max_tile))
    half_b = _round_up((b + 1) // 2, unit)
    tb = max(unit, min(cap, half_b))
    b_pad = _round_up(b, tb)
    grid = b_pad // tb

    # Per-feature phase multiplier: [unused(x slot), w*2pi, w*2pi, 0 padding].
    w_full = jnp.zeros((feat_pad,), jnp.float32)
    w_full = w_full.at[1:1 + half_dim].set(w2pi)
    w_full = w_full.at[1 + half_dim:1 + 2 * half_dim].set(w2pi)

    cost = pl.CostEstimate(
        flops=4 * b_pad * feat_pad,
        transcendentals=2 * b_pad * feat_pad,
        bytes_accessed=(b_pad * feat_pad) * dtype_bytes + (b_pad + feat_pad) * 4,
    )
    cparams = pltpu.CompilerParams(dimension_semantics=("parallel",))

    if natural:
        x_in = jnp.zeros((b_pad, 1), jnp.float32).at[:b, 0].set(x_f32)
        w_in = w_full.reshape(1, feat_pad)
        kernel = functools.partial(_fused_kernel, half_dim=half_dim, feat_axis=1)
        fused = pl.pallas_call(
            kernel,
            out_shape=jax.ShapeDtypeStruct((b_pad, feat_pad), out_dtype),
            grid=(grid,),
            in_specs=[
                pl.BlockSpec((tb, 1), lambda i: (i, 0)),          # x, tiled over B
                pl.BlockSpec((1, feat_pad), lambda i: (0, 0)),    # w, resident
            ],
            out_specs=pl.BlockSpec((tb, feat_pad), lambda i: (i, 0)),
            compiler_params=cparams,
            cost_estimate=cost,
        )(x_in, w_in)
        return fused[:b, :n_feat]                    # slice only, no transpose
    else:
        x_in = jnp.zeros((1, b_pad), jnp.float32).at[0, :b].set(x_f32)
        w_in = w_full.reshape(feat_pad, 1)
        kernel = functools.partial(_fused_kernel, half_dim=half_dim, feat_axis=0)
        fused = pl.pallas_call(
            kernel,
            out_shape=jax.ShapeDtypeStruct((feat_pad, b_pad), out_dtype),
            grid=(grid,),
            in_specs=[
                pl.BlockSpec((1, tb), lambda i: (0, i)),          # x, tiled over B
                pl.BlockSpec((feat_pad, 1), lambda i: (0, 0)),    # w, resident
            ],
            out_specs=pl.BlockSpec((feat_pad, tb), lambda i: (0, i)),
            compiler_params=cparams,
            cost_estimate=cost,
        )(x_in, w_in)
        # One transpose+slice (single XLA pass) instead of 2 transposes + concat.
        return fused.T[:b, :n_feat]


def reference(x, weights):
    x2 = x.reshape(-1, 1).astype(jnp.float32)
    freqs = x2 * weights.reshape(1, -1).astype(jnp.float32) * 2.0 * math.pi
    return jnp.concatenate([x2, jnp.sin(freqs), jnp.cos(freqs)], axis=-1)


if __name__ == "__main__":
    key = jax.random.PRNGKey(0)
    k_w1, k_x1, k_x2, k_w2, k_x3 = jax.random.split(key, 5)

    # Continuous-time diffusion convention: timesteps in [0, 1).
    # --- Small-dim (transposed-layout) path, grid == 1 ---
    dim = 16
    half_dim = dim // 2
    weights = jax.random.normal(k_w1, (half_dim,), dtype=jnp.float32)
    x = jax.random.uniform(k_x1, (8,), dtype=jnp.float32)
    out = jax.block_until_ready(random_or_learned_sinusoidal_pos_emb(x, weights))
    ref = reference(x, weights)
    assert out.shape == (8, dim + 1), out.shape
    assert jnp.allclose(out, ref, atol=1e-4, rtol=1e-4), (
        float(jnp.max(jnp.abs(out - ref))))

    # --- Small-dim path, non-multiple-of-128 batch, grid >= 2 ---
    x_big = jax.random.uniform(k_x2, (700,), dtype=jnp.float32)
    out_big = jax.block_until_ready(
        random_or_learned_sinusoidal_pos_emb(x_big, weights))
    ref_big = reference(x_big, weights)
    assert out_big.shape == (700, dim + 1), out_big.shape
    assert jnp.allclose(out_big, ref_big, atol=1e-4, rtol=1e-4), (
        float(jnp.max(jnp.abs(out_big - ref_big))))

    # --- Wide (natural-layout) path: 2*half_dim >= 128, grid >= 2 ---
    dim_w = 128
    hd_w = dim_w // 2
    weights_w = jax.random.normal(k_w2, (hd_w,), dtype=jnp.float32)
    x_w = jax.random.uniform(k_x3, (200,), dtype=jnp.float32)
    out_w = jax.block_until_ready(
        random_or_learned_sinusoidal_pos_emb(x_w, weights_w))
    ref_w = reference(x_w, weights_w)
    assert out_w.shape == (200, dim_w + 1), out_w.shape
    assert jnp.allclose(out_w, ref_w, atol=1e-4, rtol=1e-4), (
        float(jnp.max(jnp.abs(out_w - ref_w))))

    print("KERNEL_OK")
</pallas_src>

<mosaic_0001>
module attributes {stable_mosaic.version = 11 : i64} {
  func.func @_fused_kernel(%arg0: i32, %arg1: memref<1x128xf32, #tpu.memory_space<vmem>>, %arg2: memref<24x1xf32, #tpu.memory_space<vmem>>, %arg3: memref<24x128xf32, #tpu.memory_space<vmem>>) attributes {dimension_semantics = [#tpu.dimension_semantics<parallel>], iteration_bounds = array<i64: 1>, scalar_prefetch = 0 : i64, scratch_operands = 0 : i64, tpu.core_type = #tpu.core_type<tc>, window_params = [{transform_indices = @transform_0, window_bounds = array<i64: 1, 128>}, {pipeline_mode = #tpu.pipeline_mode<synchronous>, transform_indices = @transform_1, window_bounds = array<i64: 24, 1>}, {transform_indices = @transform_2, window_bounds = array<i64: 24, 128>}]} {
    %0 = tpu.iota {dimensions = array<i32: 0>} : vector<24x128xi32>
    %c0 = arith.constant 0 : index
    %c0_0 = arith.constant 0 : index
    %1 = vector.load %arg1[%c0, %c0_0] : memref<1x128xf32, #tpu.memory_space<vmem>>, vector<1x128xf32>
    %c0_1 = arith.constant 0 : index
    %c0_2 = arith.constant 0 : index
    %2 = vector.load %arg2[%c0_1, %c0_2] : memref<24x1xf32, #tpu.memory_space<vmem>>, vector<24x1xf32>
    %3 = vector.broadcast %1 : vector<1x128xf32> to vector<24x128xf32>
    %4 = vector.broadcast %2 : vector<24x1xf32> to vector<24x128xf32>
    %5 = arith.mulf %3, %4 : vector<24x128xf32>
    %c0_i32 = arith.constant 0 : i32
    %6 = vector.broadcast %c0_i32 : i32 to vector<24x128xi32>
    %7 = arith.cmpi eq, %0, %6 : vector<24x128xi32>
    %8 = vector.shape_cast %1 : vector<1x128xf32> to vector<1x128xf32>
    %9 = vector.broadcast %8 : vector<1x128xf32> to vector<24x128xf32>
    %c8_i32 = arith.constant 8 : i32
    %10 = vector.broadcast %c8_i32 : i32 to vector<24x128xi32>
    %11 = arith.cmpi sle, %0, %10 : vector<24x128xi32>
    %12 = math.sin %5 : vector<24x128xf32>
    %13 = math.cos %5 : vector<24x128xf32>
    %14 = arith.select %11, %12, %13 : vector<24x128xi1>, vector<24x128xf32>
    %15 = arith.select %7, %9, %14 : vector<24x128xi1>, vector<24x128xf32>
    %c0_3 = arith.constant 0 : index
    %c0_4 = arith.constant 0 : index
    %16 = vector.load %arg3[%c0_3, %c0_4] : memref<24x128xf32, #tpu.memory_space<vmem>>, vector<24x128xf32>
    tpu.vector_store %arg3[%c0_3, %c0_4], %15 {strides = array<i32>} : memref<24x128xf32, #tpu.memory_space<vmem>>, vector<24x128xf32>,
    return
  }
  func.func @transform_0(%arg0: i32) -> (i32, i32) {
    %c0_i32 = arith.constant 0 : i32
    %c0_i32_0 = arith.constant 0 : i32
    return %c0_i32, %arg0 : i32, i32
  }
  func.func @transform_1(%arg0: i32) -> (i32, i32) {
    %c0_i32 = arith.constant 0 : i32
    %c0_i32_0 = arith.constant 0 : i32
    %c0_i32_1 = arith.constant 0 : i32
    return %c0_i32, %c0_i32_0 : i32, i32
  }
  func.func @transform_2(%arg0: i32) -> (i32, i32) {
    %c0_i32 = arith.constant 0 : i32
    %c0_i32_0 = arith.constant 0 : i32
    return %c0_i32, %arg0 : i32, i32
  }
}

</mosaic_0001>

<llo_original>
// kernel: tpu_custom_call.1
$region0: #{tpu_custom_call.1}
  #allocation0 [shape = 'u32[]', space=smem, size = 0x4, offset = 0x4, fixed_abs, tag = 'smem constant byte address 0x4 - core index']
  #allocation1 [shape = 'u32[144,128]{1,0:T(1,128)}', space=vmem, size = 0x12000, scoped, tag = 'internal scratch']
  %s0 = inlined_call_operand.vmem [shape: f32[1,128], index: 0, kind: input, shape index: {}]
  %s1 = inlined_call_operand.vmem [shape: f32[24,1], index: 1, kind: input, shape index: {}]
  %s2 = inlined_call_operand.hbm [shape: f32[24,128], index: 2, kind: output, shape index: {}]
  %s3 = sld [smem:[#allocation0]]
  $region18: #{tpu_custom_call.1} parent=0
    _
  %s5 = ssub.s32 1, %s3
  %s6 = scalar_select 0, %s5, %s3
  $region1: #{tpu_custom_call.1} parent=0
    #allocation2 [shape = 'u8[12288]{0}', space=vmem, size = 0x3000, scoped, tag = 'output window, operand 0, single buffered']
    #allocation3 [shape = 's32[1]{0}', space=sflag, size = 0x4, scoped, tag = 'scoped memory for tpu_custom_call.1']
    %7 = vsyncpa [#allocation3], 0
    // Predicated region
    $region2: #{tpu_custom_call.1} parent=1 // pred_check
      _
    $region3: #{tpu_custom_call.1} parent=1 // pred_check_branch
      %9 = sbr.rel (0) target = $region5
    $region4: #{tpu_custom_call.1} parent=1 // pred_region
      _
    $region5: #{tpu_custom_call.1} parent=1 // pred_fallthru
      _
    // Predicated region
    $region6: #{tpu_custom_call.1} parent=1 // pred_check
      _
    $region7: #{tpu_custom_call.1} parent=1 // pred_check_branch
      %11 = sbr.rel (0) target = $region9
    $region8: #{tpu_custom_call.1} parent=1 // pred_region
      _
    $region9: #{tpu_custom_call.1} parent=1 // pred_fallthru
      _
    %v12 = vlaneseq
    %v13 = vshrl.u32 %v12, 7
    %v14 = vadd.s32 %v13, 8
    %v15 = vadd.s32 %v13, 16
    %v16 = vld [vmem:[%s0] sm:$0x1]
    %v17 = vld [vmem:[%s1] sm:$0xff]
    %v18 = vld [vmem:[%s1 + $0x8] sm:$0xff]
    %v19 = vld [vmem:[%s1 + $0x10] sm:$0xff]
    %v21 = vlaneseq
    %v22 = vshrl.u32 %v21, 7
    %v23 = vsub.s32 0, %v22
    %v24 = vrot.slane %v16, %v23
    %27 = vset.pattern.permute.xlu0 0
    %28 = vperm.xlu0 %27, %v17
    %v29 = vpop.permute.xlu0 %28
    %32 = vset.pattern.permute.xlu0 0
    %33 = vperm.xlu0 %32, %v18
    %v34 = vpop.permute.xlu0 %33
    %37 = vset.pattern.permute.xlu0 0
    %38 = vperm.xlu0 %37, %v19
    %v39 = vpop.permute.xlu0 %38
    %v41 = vmul.f32 %v24, %v29
    %v42 = vmul.f32 %v24, %v34
    %v43 = vmul.f32 %v24, %v39
    %vm44 = vcmp.eq.s32.totalorder %v13, 0
    %vm45 = vcmp.eq.s32.totalorder %v14, 0
    %vm46 = vcmp.eq.s32.totalorder %v15, 0
    %vm47 = vcmp.le.s32.totalorder %v13, 8
    %vm48 = vcmp.le.s32.totalorder %v14, 8
    %vm49 = vcmp.le.s32.totalorder %v15, 8
    %v50 = vand.u32 2147483647, %v41
    %vm51 = vcmp.le.f32.partialorder %v50, 0.7853982
    %vm52 = vcmp.lt.s32.totalorder %v41, 0
    %v53 = vand.u32 %v41, 2139095040
    %v54 = vshrl.u32 %v53, 23
    %v55 = vsub.s32 %v54, 127
    %v56 = vand.u32 2147483647, %v41
    %v57 = vand.u32 %v56, 8388607
    %v58 = vor.u32 %v57, 8388608
    %v59 = vsub.s32 0, %v58
    %v60 = vadd.s32 %v55, 1
    %vm61 = vcmp.gt.s32.totalorder %v60, 0
    %v62 = vsel %vm61, %v60, 0
    %v63 = vshrl.u32 %v62, 5
    %v64 = vand.u32 %v62, 31
    %v65 = vsub.s32 32, %v64
    %v66 = vshrl.u32 683565275, %v65
    %v67 = vshll.u32 683565275, %v64
    %v68 = vshrl.u32 2475754826, %v65
    %v69 = vor.u32 %v67, %v68
    %v70 = vshll.u32 2475754826, %v64
    %v71 = vshrl.u32 2131351028, %v65
    %v72 = vor.u32 %v70, %v71
    %v73 = vshll.u32 2131351028, %v64
    %v74 = vshrl.u32 2102212464, %v65
    %v75 = vor.u32 %v73, %v74
    %v76 = vshll.u32 2102212464, %v64
    %v77 = vshrl.u32 920167782, %v65
    %v78 = vor.u32 %v76, %v77
    %v79 = vshll.u32 920167782, %v64
    %v80 = vshrl.u32 1326507024, %v65
    %v81 = vor.u32 %v79, %v80
    %vm82 = vcmp.lt.s32.totalorder %v63, 1
    %vm83 = vcmp.lt.s32.totalorder %v63, 2
    %vm84 = vcmp.lt.s32.totalorder %v63, 3
    %vm85 = vcmp.lt.s32.totalorder %v63, 4
    %v86 = vsel %vm82, %v66, %v69
    %v87 = vsel %vm85, %v75, 2102212464
    %v88 = vsel %vm84, %v72, %v87
    %v89 = vsel %vm83, %v86, %v88
    %v90 = vsel %vm82, %v69, %v72
    %v91 = vsel %vm85, %v78, 920167782
    %v92 = vsel %vm84, %v75, %v91
    %v93 = vsel %vm83, %v90, %v92
    %v94 = vsel %vm82, %v72, %v75
    %v95 = vsel %vm85, %v81, 1326507024
    %v96 = vsel %vm84, %v78, %v95
    %v97 = vsel %vm83, %v94, %v96
    %v98 = vshll.u32 %v58, 8
    %v99 = vmul.u32.u64.compose %v98, %v97
    %v100 = vextract.low.u32 %v99
    %v101 = vextract.high.u32 %v99
    %v102 = vmul.u32.u64.compose %v98, %v93
    %v103 = vextract.low.u32 %v102
    %v104 = vextract.high.u32 %v102
    %v105 = vmul.u32 %v98, %v89
    %v106 = vadd.s32 %v101, %v103
    %vm107 = vc.u32 %v101, %v103
    %v108 = vadd.s32 %v104, 1
    %v109 = vsel %vm107, %v108, %v104
    %v110 = vadd.s32 %v105, %v109
    %v111 = vadd.s32 %v110, 536870912
    %v112 = vshrl.u32 %v111, 30
    %v113 = vshll.u32 %v112, 30
    %v114 = vsub.s32 %v110, %v113
    %vm115 = vcmp.lt.s32.totalorder %v114, 0
    %v116 = vsub.s32 0, %v114
    %v117 = vsel %vm115, %v116, %v114
    %v118 = vclz %v117
    %v119 = vsub.s32 %v118, 2
    %vm120 = vcmp.gt.s32.totalorder 0, %v119
    %v121 = vsel %vm120, 0, %v119
    %v122 = vsub.s32 32, %v121
    %v123 = vshll.u32 %v114, %v121
    %v124 = vshrl.u32 %v106, %v122
    %v125 = vor.u32 %v123, %v124
    %v126 = vsub.s32 4294967266, %v121
    %v127 = vadd.s32 %v126, 127
    %v128 = vshll.u32 %v127, 23
    %v129 = vor.u32 4788187, %v128
    %v130 = vand.u32 2147483647, %v129
    %v132 = vcvt.s32.f32 %v125
    %v133 = vmul.f32 %v132, %v130
    %v134 = vxor.u32 %v133, 2147483648
    %v135 = vsel %vm52, %v134, %v133
    %v136 = vsub.s32 4, %v112
    %v137 = vsel %vm52, %v136, %v112
    %v138 = vsel %vm51, %v41, %v135
    %v139 = vsel %vm51, 0, %v137
    %v140 = vcosq.f32.pop %v138
    %v141 = vsinq.f32.pop %v138
    %vm142 = vweird.f32 %v41
    %v143 = vadd.s32 %v139, 3
    %v144 = vand.u32 %v143, 3
    %vm145 = vcmp.lt.s32.totalorder %v144, 2
    %vm146 = vcmp.eq.s32.totalorder %v144, 0
    %v147 = vxor.u32 %v141, 2147483648
    %v148 = vsel %vm146, %v140, %v147
    %vm149 = vcmp.eq.s32.totalorder %v144, 2
    %v150 = vxor.u32 %v140, 2147483648
    %v151 = vsel %vm149, %v150, %v141
    %v152 = vsel %vm145, %v148, %v151
    %v153 = vsel %vm142, nan, %v152
    %v154 = vand.u32 2147483647, %v42
    %vm155 = vcmp.le.f32.partialorder %v154, 0.7853982
    %vm156 = vcmp.lt.s32.totalorder %v42, 0
    %v157 = vand.u32 %v42, 2139095040
    %v158 = vshrl.u32 %v157, 23
    %v159 = vsub.s32 %v158, 127
    %v160 = vand.u32 2147483647, %v42
    %v161 = vand.u32 %v160, 8388607
    %v162 = vor.u32 %v161, 8388608
    %v163 = vsub.s32 0, %v162
    %v164 = vadd.s32 %v159, 1
    %vm165 = vcmp.gt.s32.totalorder %v164, 0
    %v166 = vsel %vm165, %v164, 0
    %v167 = vshrl.u32 %v166, 5
    %v168 = vand.u32 %v166, 31
    %v169 = vsub.s32 32, %v168
    %v170 = vshrl.u32 683565275, %v169
    %v171 = vshll.u32 683565275, %v168
    %v172 = vshrl.u32 2475754826, %v169
    %v173 = vor.u32 %v171, %v172
    %v174 = vshll.u32 2475754826, %v168
    %v175 = vshrl.u32 2131351028, %v169
    %v176 = vor.u32 %v174, %v175
    %v177 = vshll.u32 2131351028, %v168
    %v178 = vshrl.u32 2102212464, %v169
    %v179 = vor.u32 %v177, %v178
    %v180 = vshll.u32 2102212464, %v168
    %v181 = vshrl.u32 920167782, %v169
    %v182 = vor.u32 %v180, %v181
    %v183 = vshll.u32 920167782, %v168
    %v184 = vshrl.u32 1326507024, %v169
    %v185 = vor.u32 %v183, %v184
    %vm186 = vcmp.lt.s32.totalorder %v167, 1
    %vm187 = vcmp.lt.s32.totalorder %v167, 2
    %vm188 = vcmp.lt.s32.totalorder %v167, 3
    %vm189 = vcmp.lt.s32.totalorder %v167, 4
    %v190 = vsel %vm186, %v170, %v173
    %v191 = vsel %vm189, %v179, 2102212464
    %v192 = vsel %vm188, %v176, %v191
    %v193 = vsel %vm187, %v190, %v192
    %v194 = vsel %vm186, %v173, %v176
    %v195 = vsel %vm189, %v182, 920167782
    %v196 = vsel %vm188, %v179, %v195
    %v197 = vsel %vm187, %v194, %v196
    %v198 = vsel %vm186, %v176, %v179
    %v199 = vsel %vm189, %v185, 1326507024
    %v200 = vsel %vm188, %v182, %v199
    %v201 = vsel %vm187, %v198, %v200
    %v202 = vshll.u32 %v162, 8
    %v203 = vmul.u32.u64.compose %v202, %v201
    %v204 = vextract.low.u32 %v203
    %v205 = vextract.high.u32 %v203
    %v206 = vmul.u32.u64.compose %v202, %v197
    %v207 = vextract.low.u32 %v206
    %v208 = vextract.high.u32 %v206
    %v209 = vmul.u32 %v202, %v193
    %v210 = vadd.s32 %v205, %v207
    %vm211 = vc.u32 %v205, %v207
    %v212 = vadd.s32 %v208, 1
    %v213 = vsel %vm211, %v212, %v208
    %v214 = vadd.s32 %v209, %v213
    %v215 = vadd.s32 %v214, 536870912
    %v216 = vshrl.u32 %v215, 30
    %v217 = vshll.u32 %v216, 30
    %v218 = vsub.s32 %v214, %v217
    %vm219 = vcmp.lt.s32.totalorder %v218, 0
    %v220 = vsub.s32 0, %v218
    %v221 = vsel %vm219, %v220, %v218
    %v222 = vclz %v221
    %v223 = vsub.s32 %v222, 2
    %vm224 = vcmp.gt.s32.totalorder 0, %v223
    %v225 = vsel %vm224, 0, %v223
    %v226 = vsub.s32 32, %v225
    %v227 = vshll.u32 %v218, %v225
    %v228 = vshrl.u32 %v210, %v226
    %v229 = vor.u32 %v227, %v228
    %v230 = vsub.s32 4294967266, %v225
    %v231 = vadd.s32 %v230, 127
    %v232 = vshll.u32 %v231, 23
    %v233 = vor.u32 4788187, %v232
    %v234 = vand.u32 2147483647, %v233
    %v236 = vcvt.s32.f32 %v229
    %v237 = vmul.f32 %v236, %v234
    %v238 = vxor.u32 %v237, 2147483648
    %v239 = vsel %vm156, %v238, %v237
    %v240 = vsub.s32 4, %v216
    %v241 = vsel %vm156, %v240, %v216
    %v242 = vsel %vm155, %v42, %v239
    %v243 = vsel %vm155, 0, %v241
    %v244 = vcosq.f32.pop %v242
    %v245 = vsinq.f32.pop %v242
    %vm246 = vweird.f32 %v42
    %v247 = vadd.s32 %v243, 3
    %v248 = vand.u32 %v247, 3
    %vm249 = vcmp.lt.s32.totalorder %v248, 2
    %vm250 = vcmp.eq.s32.totalorder %v248, 0
    %v251 = vxor.u32 %v245, 2147483648
    %v252 = vsel %vm250, %v244, %v251
    %vm253 = vcmp.eq.s32.totalorder %v248, 2
    %v254 = vxor.u32 %v244, 2147483648
    %v255 = vsel %vm253, %v254, %v245
    %v256 = vsel %vm249, %v252, %v255
    %v257 = vsel %vm246, nan, %v256
    %v258 = vand.u32 2147483647, %v43
    %vm259 = vcmp.le.f32.partialorder %v258, 0.7853982
    %vm260 = vcmp.lt.s32.totalorder %v43, 0
    %v261 = vand.u32 %v43, 2139095040
    %v262 = vshrl.u32 %v261, 23
    %v263 = vsub.s32 %v262, 127
    %v264 = vand.u32 2147483647, %v43
    %v265 = vand.u32 %v264, 8388607
    %v266 = vor.u32 %v265, 8388608
    %v267 = vsub.s32 0, %v266
    %v268 = vadd.s32 %v263, 1
    %vm269 = vcmp.gt.s32.totalorder %v268, 0
    %v270 = vsel %vm269, %v268, 0
    %v271 = vshrl.u32 %v270, 5
    %v272 = vand.u32 %v270, 31
    %v273 = vsub.s32 32, %v272
    %v274 = vshrl.u32 683565275, %v273
    %v275 = vshll.u32 683565275, %v272
    %v276 = vshrl.u32 2475754826, %v273
    %v277 = vor.u32 %v275, %v276
    %v278 = vshll.u32 2475754826, %v272
    %v279 = vshrl.u32 2131351028, %v273
    %v280 = vor.u32 %v278, %v279
    %v281 = vshll.u32 2131351028, %v272
    %v282 = vshrl.u32 2102212464, %v273
    %v283 = vor.u32 %v281, %v282
    %v284 = vshll.u32 2102212464, %v272
    %v285 = vshrl.u32 920167782, %v273
    %v286 = vor.u32 %v284, %v285
    %v287 = vshll.u32 920167782, %v272
    %v288 = vshrl.u32 1326507024, %v273
    %v289 = vor.u32 %v287, %v288
    %vm290 = vcmp.lt.s32.totalorder %v271, 1
    %vm291 = vcmp.lt.s32.totalorder %v271, 2
    %vm292 = vcmp.lt.s32.totalorder %v271, 3
    %vm293 = vcmp.lt.s32.totalorder %v271, 4
    %v294 = vsel %vm290, %v274, %v277
    %v295 = vsel %vm293, %v283, 2102212464
    %v296 = vsel %vm292, %v280, %v295
    %v297 = vsel %vm291, %v294, %v296
    %v298 = vsel %vm290, %v277, %v280
    %v299 = vsel %vm293, %v286, 920167782
    %v300 = vsel %vm292, %v283, %v299
    %v301 = vsel %vm291, %v298, %v300
    %v302 = vsel %vm290, %v280, %v283
    %v303 = vsel %vm293, %v289, 1326507024
    %v304 = vsel %vm292, %v286, %v303
    %v305 = vsel %vm291, %v302, %v304
    %v306 = vshll.u32 %v266, 8
    %v307 = vmul.u32.u64.compose %v306, %v305
    %v308 = vextract.low.u32 %v307
    %v309 = vextract.high.u32 %v307
    %v310 = vmul.u32.u64.compose %v306, %v301
    %v311 = vextract.low.u32 %v310
    %v312 = vextract.high.u32 %v310
    %v313 = vmul.u32 %v306, %v297
    %v314 = vadd.s32 %v309, %v311
    %vm315 = vc.u32 %v309, %v311
    %v316 = vadd.s32 %v312, 1
    %v317 = vsel %vm315, %v316, %v312
    %v318 = vadd.s32 %v313, %v317
    %v319 = vadd.s32 %v318, 536870912
    %v320 = vshrl.u32 %v319, 30
    %v321 = vshll.u32 %v320, 30
    %v322 = vsub.s32 %v318, %v321
    %vm323 = vcmp.lt.s32.totalorder %v322, 0
    %v324 = vsub.s32 0, %v322
    %v325 = vsel %vm323, %v324, %v322
    %v326 = vclz %v325
    %v327 = vsub.s32 %v326, 2
    %vm328 = vcmp.gt.s32.totalorder 0, %v327
    %v329 = vsel %vm328, 0, %v327
    %v330 = vsub.s32 32, %v329
    %v331 = vshll.u32 %v322, %v329
    %v332 = vshrl.u32 %v314, %v330
    %v333 = vor.u32 %v331, %v332
    %v334 = vsub.s32 4294967266, %v329
    %v335 = vadd.s32 %v334, 127
    %v336 = vshll.u32 %v335, 23
    %v337 = vor.u32 4788187, %v336
    %v338 = vand.u32 2147483647, %v337
    %v340 = vcvt.s32.f32 %v333
    %v341 = vmul.f32 %v340, %v338
    %v342 = vxor.u32 %v341, 2147483648
    %v343 = vsel %vm260, %v342, %v341
    %v344 = vsub.s32 4, %v320
    %v345 = vsel %vm260, %v344, %v320
    %v346 = vsel %vm259, %v43, %v343
    %v347 = vsel %vm259, 0, %v345
    %v348 = vcosq.f32.pop %v346
    %v349 = vsinq.f32.pop %v346
    %vm350 = vweird.f32 %v43
    %v351 = vadd.s32 %v347, 3
    %v352 = vand.u32 %v351, 3
    %vm353 = vcmp.lt.s32.totalorder %v352, 2
    %vm354 = vcmp.eq.s32.totalorder %v352, 0
    %v355 = vxor.u32 %v349, 2147483648
    %v356 = vsel %vm354, %v348, %v355
    %vm357 = vcmp.eq.s32.totalorder %v352, 2
    %v358 = vxor.u32 %v348, 2147483648
    %v359 = vsel %vm357, %v358, %v349
    %v360 = vsel %vm353, %v356, %v359
    %v361 = vsel %vm350, nan, %v360
    %v362 = vand.u32 2147483647, %v41
    %vm363 = vcmp.le.f32.partialorder %v362, 0.7853982
    %vm364 = vcmp.lt.s32.totalorder %v41, 0
    %v365 = vand.u32 %v41, 2139095040
    %v366 = vshrl.u32 %v365, 23
    %v367 = vsub.s32 %v366, 127
    %v368 = vand.u32 2147483647, %v41
    %v369 = vand.u32 %v368, 8388607
    %v370 = vor.u32 %v369, 8388608
    %v371 = vsub.s32 0, %v370
    %v372 = vadd.s32 %v367, 1
    %vm373 = vcmp.gt.s32.totalorder %v372, 0
    %v374 = vsel %vm373, %v372, 0
    %v375 = vshrl.u32 %v374, 5
    %v376 = vand.u32 %v374, 31
    %v377 = vsub.s32 32, %v376
    %v378 = vshrl.u32 683565275, %v377
    %v379 = vshll.u32 683565275, %v376
    %v380 = vshrl.u32 2475754826, %v377
    %v381 = vor.u32 %v379, %v380
    %v382 = vshll.u32 2475754826, %v376
    %v383 = vshrl.u32 2131351028, %v377
    %v384 = vor.u32 %v382, %v383
    %v385 = vshll.u32 2131351028, %v376
    %v386 = vshrl.u32 2102212464, %v377
    %v387 = vor.u32 %v385, %v386
    %v388 = vshll.u32 2102212464, %v376
    %v389 = vshrl.u32 920167782, %v377
    %v390 = vor.u32 %v388, %v389
    %v391 = vshll.u32 920167782, %v376
    %v392 = vshrl.u32 1326507024, %v377
    %v393 = vor.u32 %v391, %v392
    %vm394 = vcmp.lt.s32.totalorder %v375, 1
    %vm395 = vcmp.lt.s32.totalorder %v375, 2
    %vm396 = vcmp.lt.s32.totalorder %v375, 3
    %vm397 = vcmp.lt.s32.totalorder %v375, 4
    %v398 = vsel %vm394, %v378, %v381
    %v399 = vsel %vm397, %v387, 2102212464
    %v400 = vsel %vm396, %v384, %v399
    %v401 = vsel %vm395, %v398, %v400
    %v402 = vsel %vm394, %v381, %v384
    %v403 = vsel %vm397, %v390, 920167782
    %v404 = vsel %vm396, %v387, %v403
    %v405 = vsel %vm395, %v402, %v404
    %v406 = vsel %vm394, %v384, %v387
    %v407 = vsel %vm397, %v393, 1326507024
    %v408 = vsel %vm396, %v390, %v407
    %v409 = vsel %vm395, %v406, %v408
    %v410 = vshll.u32 %v370, 8
    %v411 = vmul.u32.u64.compose %v410, %v409
    %v412 = vextract.low.u32 %v411
    %v413 = vextract.high.u32 %v411
    %v414 = vmul.u32.u64.compose %v410, %v405
    %v415 = vextract.low.u32 %v414
    %v416 = vextract.high.u32 %v414
    %v417 = vmul.u32 %v410, %v401
    %v418 = vadd.s32 %v413, %v415
    %vm419 = vc.u32 %v413, %v415
    %v420 = vadd.s32 %v416, 1
    %v421 = vsel %vm419, %v420, %v416
    %v422 = vadd.s32 %v417, %v421
    %v423 = vadd.s32 %v422, 536870912
    %v424 = vshrl.u32 %v423, 30
    %v425 = vshll.u32 %v424, 30
    %v426 = vsub.s32 %v422, %v425
    %vm427 = vcmp.lt.s32.totalorder %v426, 0
    %v428 = vsub.s32 0, %v426
    %v429 = vsel %vm427, %v428, %v426
    %v430 = vclz %v429
    %v431 = vsub.s32 %v430, 2
    %vm432 = vcmp.gt.s32.totalorder 0, %v431
    %v433 = vsel %vm432, 0, %v431
    %v434 = vsub.s32 32, %v433
    %v435 = vshll.u32 %v426, %v433
    %v436 = vshrl.u32 %v418, %v434
    %v437 = vor.u32 %v435, %v436
    %v438 = vsub.s32 4294967266, %v433
    %v439 = vadd.s32 %v438, 127
    %v440 = vshll.u32 %v439, 23
    %v441 = vor.u32 4788187, %v440
    %v442 = vand.u32 2147483647, %v441
    %v444 = vcvt.s32.f32 %v437
    %v445 = vmul.f32 %v444, %v442
    %v446 = vxor.u32 %v445, 2147483648
    %v447 = vsel %vm364, %v446, %v445
    %v448 = vsub.s32 4, %v424
    %v449 = vsel %vm364, %v448, %v424
    %v450 = vsel %vm363, %v41, %v447
    %v451 = vsel %vm363, 0, %v449
    %v452 = vcosq.f32.pop %v450
    %v453 = vsinq.f32.pop %v450
    %vm454 = vweird.f32 %v41
    %v455 = vand.u32 %v451, 3
    %vm456 = vcmp.lt.s32.totalorder %v455, 2
    %vm457 = vcmp.eq.s32.totalorder %v455, 0
    %v458 = vxor.u32 %v453, 2147483648
    %v459 = vsel %vm457, %v452, %v458
    %vm460 = vcmp.eq.s32.totalorder %v455, 2
    %v461 = vxor.u32 %v452, 2147483648
    %v462 = vsel %vm460, %v461, %v453
    %v463 = vsel %vm456, %v459, %v462
    %v464 = vsel %vm454, nan, %v463
    %v465 = vand.u32 2147483647, %v42
    %vm466 = vcmp.le.f32.partialorder %v465, 0.7853982
    %vm467 = vcmp.lt.s32.totalorder %v42, 0
    %v468 = vand.u32 %v42, 2139095040
    %v469 = vshrl.u32 %v468, 23
    %v470 = vsub.s32 %v469, 127
    %v471 = vand.u32 2147483647, %v42
    %v472 = vand.u32 %v471, 8388607
    %v473 = vor.u32 %v472, 8388608
    %v474 = vsub.s32 0, %v473
    %v475 = vadd.s32 %v470, 1
    %vm476 = vcmp.gt.s32.totalorder %v475, 0
    %v477 = vsel %vm476, %v475, 0
    %v478 = vshrl.u32 %v477, 5
    %v479 = vand.u32 %v477, 31
    %v480 = vsub.s32 32, %v479
    %v481 = vshrl.u32 683565275, %v480
    %v482 = vshll.u32 683565275, %v479
    %v483 = vshrl.u32 2475754826, %v480
    %v484 = vor.u32 %v482, %v483
    %v485 = vshll.u32 2475754826, %v479
    %v486 = vshrl.u32 2131351028, %v480
    %v487 = vor.u32 %v485, %v486
    %v488 = vshll.u32 2131351028, %v479
    %v489 = vshrl.u32 2102212464, %v480
    %v490 = vor.u32 %v488, %v489
    %v491 = vshll.u32 2102212464, %v479
    %v492 = vshrl.u32 920167782, %v480
    %v493 = vor.u32 %v491, %v492
    %v494 = vshll.u32 920167782, %v479
    %v495 = vshrl.u32 1326507024, %v480
    %v496 = vor.u32 %v494, %v495
    %vm497 = vcmp.lt.s32.totalorder %v478, 1
    %vm498 = vcmp.lt.s32.totalorder %v478, 2
    %vm499 = vcmp.lt.s32.totalorder %v478, 3
    %vm500 = vcmp.lt.s32.totalorder %v478, 4
    %v501 = vsel %vm497, %v481, %v484
    %v502 = vsel %vm500, %v490, 2102212464
    %v503 = vsel %vm499, %v487, %v502
    %v504 = vsel %vm498, %v501, %v503
    %v505 = vsel %vm497, %v484, %v487
    %v506 = vsel %vm500, %v493, 920167782
    %v507 = vsel %vm499, %v490, %v506
    %v508 = vsel %vm498, %v505, %v507
    %v509 = vsel %vm497, %v487, %v490
    %v510 = vsel %vm500, %v496, 1326507024
    %v511 = vsel %vm499, %v493, %v510
    %v512 = vsel %vm498, %v509, %v511
    %v513 = vshll.u32 %v473, 8
    %v514 = vmul.u32.u64.compose %v513, %v512
    %v515 = vextract.low.u32 %v514
    %v516 = vextract.high.u32 %v514
    %v517 = vmul.u32.u64.compose %v513, %v508
    %v518 = vextract.low.u32 %v517
    %v519 = vextract.high.u32 %v517
    %v520 = vmul.u32 %v513, %v504
    %v521 = vadd.s32 %v516, %v518
    %vm522 = vc.u32 %v516, %v518
    %v523 = vadd.s32 %v519, 1
    %v524 = vsel %vm522, %v523, %v519
    %v525 = vadd.s32 %v520, %v524
    %v526 = vadd.s32 %v525, 536870912
    %v527 = vshrl.u32 %v526, 30
    %v528 = vshll.u32 %v527, 30
    %v529 = vsub.s32 %v525, %v528
    %vm530 = vcmp.lt.s32.totalorder %v529, 0
    %v531 = vsub.s32 0, %v529
    %v532 = vsel %vm530, %v531, %v529
    %v533 = vclz %v532
    %v534 = vsub.s32 %v533, 2
    %vm535 = vcmp.gt.s32.totalorder 0, %v534
    %v536 = vsel %vm535, 0, %v534
    %v537 = vsub.s32 32, %v536
    %v538 = vshll.u32 %v529, %v536
    %v539 = vshrl.u32 %v521, %v537
    %v540 = vor.u32 %v538, %v539
    %v541 = vsub.s32 4294967266, %v536
    %v542 = vadd.s32 %v541, 127
    %v543 = vshll.u32 %v542, 23
    %v544 = vor.u32 4788187, %v543
    %v545 = vand.u32 2147483647, %v544
    %v547 = vcvt.s32.f32 %v540
    %v548 = vmul.f32 %v547, %v545
    %v549 = vxor.u32 %v548, 2147483648
    %v550 = vsel %vm467, %v549, %v548
    %v551 = vsub.s32 4, %v527
    %v552 = vsel %vm467, %v551, %v527
    %v553 = vsel %vm466, %v42, %v550
    %v554 = vsel %vm466, 0, %v552
    %v555 = vcosq.f32.pop %v553
    %v556 = vsinq.f32.pop %v553
    %vm557 = vweird.f32 %v42
    %v558 = vand.u32 %v554, 3
    %vm559 = vcmp.lt.s32.totalorder %v558, 2
    %vm560 = vcmp.eq.s32.totalorder %v558, 0
    %v561 = vxor.u32 %v556, 2147483648
    %v562 = vsel %vm560, %v555, %v561
    %vm563 = vcmp.eq.s32.totalorder %v558, 2
    %v564 = vxor.u32 %v555, 2147483648
    %v565 = vsel %vm563, %v564, %v556
    %v566 = vsel %vm559, %v562, %v565
    %v567 = vsel %vm557, nan, %v566
    %v568 = vand.u32 2147483647, %v43
    %vm569 = vcmp.le.f32.partialorder %v568, 0.7853982
    %vm570 = vcmp.lt.s32.totalorder %v43, 0
    %v571 = vand.u32 %v43, 2139095040
    %v572 = vshrl.u32 %v571, 23
    %v573 = vsub.s32 %v572, 127
    %v574 = vand.u32 2147483647, %v43
    %v575 = vand.u32 %v574, 8388607
    %v576 = vor.u32 %v575, 8388608
    %v577 = vsub.s32 0, %v576
    %v578 = vadd.s32 %v573, 1
    %vm579 = vcmp.gt.s32.totalorder %v578, 0
    %v580 = vsel %vm579, %v578, 0
    %v581 = vshrl.u32 %v580, 5
    %v582 = vand.u32 %v580, 31
    %v583 = vsub.s32 32, %v582
    %v584 = vshrl.u32 683565275, %v583
    %v585 = vshll.u32 683565275, %v582
    %v586 = vshrl.u32 2475754826, %v583
    %v587 = vor.u32 %v585, %v586
    %v588 = vshll.u32 2475754826, %v582
    %v589 = vshrl.u32 2131351028, %v583
    %v590 = vor.u32 %v588, %v589
    %v591 = vshll.u32 2131351028, %v582
    %v592 = vshrl.u32 2102212464, %v583
    %v593 = vor.u32 %v591, %v592
    %v594 = vshll.u32 2102212464, %v582
    %v595 = vshrl.u32 920167782, %v583
    %v596 = vor.u32 %v594, %v595
    %v597 = vshll.u32 920167782, %v582
    %v598 = vshrl.u32 1326507024, %v583
    %v599 = vor.u32 %v597, %v598
    %vm600 = vcmp.lt.s32.totalorder %v581, 1
    %vm601 = vcmp.lt.s32.totalorder %v581, 2
    %vm602 = vcmp.lt.s32.totalorder %v581, 3
    %vm603 = vcmp.lt.s32.totalorder %v581, 4
    %v604 = vsel %vm600, %v584, %v587
    %v605 = vsel %vm603, %v593, 2102212464
    %v606 = vsel %vm602, %v590, %v605
    %v607 = vsel %vm601, %v604, %v606
    %v608 = vsel %vm600, %v587, %v590
    %v609 = vsel %vm603, %v596, 920167782
    %v610 = vsel %vm602, %v593, %v609
    %v611 = vsel %vm601, %v608, %v610
    %v612 = vsel %vm600, %v590, %v593
    %v613 = vsel %vm603, %v599, 1326507024
    %v614 = vsel %vm602, %v596, %v613
    %v615 = vsel %vm601, %v612, %v614
    %v616 = vshll.u32 %v576, 8
    %v617 = vmul.u32.u64.compose %v616, %v615
    %v618 = vextract.low.u32 %v617
    %v619 = vextract.high.u32 %v617
    %v620 = vmul.u32.u64.compose %v616, %v611
    %v621 = vextract.low.u32 %v620
    %v622 = vextract.high.u32 %v620
    %v623 = vmul.u32 %v616, %v607
    %v624 = vadd.s32 %v619, %v621
    %vm625 = vc.u32 %v619, %v621
    %v626 = vadd.s32 %v622, 1
    %v627 = vsel %vm625, %v626, %v622
    %v628 = vadd.s32 %v623, %v627
    %v629 = vadd.s32 %v628, 536870912
    %v630 = vshrl.u32 %v629, 30
    %v631 = vshll.u32 %v630, 30
    %v632 = vsub.s32 %v628, %v631
    %vm633 = vcmp.lt.s32.totalorder %v632, 0
    %v634 = vsub.s32 0, %v632
    %v635 = vsel %vm633, %v634, %v632
    %v636 = vclz %v635
    %v637 = vsub.s32 %v636, 2
    %vm638 = vcmp.gt.s32.totalorder 0, %v637
    %v639 = vsel %vm638, 0, %v637
    %v640 = vsub.s32 32, %v639
    %v641 = vshll.u32 %v632, %v639
    %v642 = vshrl.u32 %v624, %v640
    %v643 = vor.u32 %v641, %v642
    %v644 = vsub.s32 4294967266, %v639
    %v645 = vadd.s32 %v644, 127
    %v646 = vshll.u32 %v645, 23
    %v647 = vor.u32 4788187, %v646
    %v648 = vand.u32 2147483647, %v647
    %v650 = vcvt.s32.f32 %v643
    %v651 = vmul.f32 %v650, %v648
    %v652 = vxor.u32 %v651, 2147483648
    %v653 = vsel %vm570, %v652, %v651
    %v654 = vsub.s32 4, %v630
    %v655 = vsel %vm570, %v654, %v630
    %v656 = vsel %vm569, %v43, %v653
    %v657 = vsel %vm569, 0, %v655
    %v658 = vcosq.f32.pop %v656
    %v659 = vsinq.f32.pop %v656
    %vm660 = vweird.f32 %v43
    %v661 = vand.u32 %v657, 3
    %vm662 = vcmp.lt.s32.totalorder %v661, 2
    %vm663 = vcmp.eq.s32.totalorder %v661, 0
    %v664 = vxor.u32 %v659, 2147483648
    %v665 = vsel %vm663, %v658, %v664
    %vm666 = vcmp.eq.s32.totalorder %v661, 2
    %v667 = vxor.u32 %v658, 2147483648
    %v668 = vsel %vm666, %v667, %v659
    %v669 = vsel %vm662, %v665, %v668
    %v670 = vsel %vm660, nan, %v669
    %v671 = vsel %vm47, %v153, %v464
    %v672 = vsel %vm48, %v257, %v567
    %v673 = vsel %vm49, %v361, %v670
    %v674 = vsel %vm44, %v24, %v671
    %v675 = vsel %vm45, %v24, %v672
    %v676 = vsel %vm46, %v24, %v673
    %677 = vst [vmem:[#allocation2] sm:$0xff] %v674
    %678 = vst [vmem:[#allocation2 + $0x8] sm:$0xff] %v675
    %679 = vst [vmem:[#allocation2 + $0x10] sm:$0xff] %v676
    // Predicated region
    $region10: #{tpu_custom_call.1} parent=1 // pred_check
      _
    $region11: #{tpu_custom_call.1} parent=1 // pred_check_branch
      %681 = sbr.rel (0) target = $region13
    $region12: #{tpu_custom_call.1} parent=1 // pred_region
      %s683 = ssub.s32 384, 384
      %684 = vsyncadd [#allocation3], %s683
      %s685 = sshll.u32 [#allocation2], 4
      %s686 = int_to_ptr.vmem [resolvable:$true] %s685
      %691 = dma.vmem_to_hbm [thread:$0]  %s686, 384, %s2, [#allocation3], 128, 128, 8
    $region13: #{tpu_custom_call.1} parent=1 // pred_fallthru
      _
    // Predicated region
    $region14: #{tpu_custom_call.1} parent=1 // pred_check
      _
    $region15: #{tpu_custom_call.1} parent=1 // pred_check_branch
      %693 = sbr.rel (0) target = $region17
    $region16: #{tpu_custom_call.1} parent=1 // pred_region
      %694 = dma.done [#allocation3], 384
    $region17: #{tpu_custom_call.1} parent=1 // pred_fallthru
      _
    %695 = vsyncpa [#allocation3], 1

</llo_original>
